<compile_context>
chip_gen: v6e
topology: v6e:2x2x1
jax: 0.10.0
libtpu: 0.0.40
codegen_flags: <defaults>
</compile_context>

<pallas_src>
import jax
import jax.numpy as jnp
from jax import lax
from jax.experimental import pallas as pl
from jax.experimental.pallas import tpu as pltpu


_LANE = 128
_SUBLANE = 8


def _detector_kernel(x_ref, w1_ref, b1_ref, w2t_ref, b2_ref, ot_ref):
    # Hidden layer on the MXU, f32 accumulation: (tb, F) @ (F, H) -> (tb, H).
    h = jnp.dot(x_ref[...], w1_ref[...], preferred_element_type=jnp.float32)
    f = jax.nn.sigmoid(h + b1_ref[...])            # b1 is (1, H), sublane-broadcast
    # Second layer emitted TRANSPOSED so the store is lane-dense along batch:
    #   out_T[o, b] = sum_h w2_t[o, h] * f[b, h]   -> (O, tb)
    # (lhs plain, rhs contracted on its last dim == transpose_rhs matmul.)
    out_t = lax.dot_general(
        w2t_ref[...], f.astype(w2t_ref.dtype),
        dimension_numbers=(((1,), (1,)), ((), ())),
        preferred_element_type=jnp.float32)
    ot_ref[...] = (out_t + b2_ref[...]).astype(ot_ref.dtype)   # b2 is (O, 1)


def _choose_batch_tile(B, block_b):
    """Pick a batch tile that keeps blocks legal and both v7x TCs busy."""
    if B > block_b:
        return block_b                         # many tiles; block_b % 128 == 0
    if B >= 2 * _LANE and B % (2 * _LANE) == 0:
        return B // 2                          # exactly 2 tiles (v7x megacore)
    return B                                   # single full-extent tile


def detector_v2_forward(x, w1, b1, w2, b2, *, block_b=8192):
    """Fused Detector_v2 forward: sigmoid(x @ w1 + b1) @ w2 + b2.

    x : [B, feature_dim]            (f32, or bf16 if stored bf16 upstream)
    w1: [feature_dim, detect_dim]   (pre-transposed nn.Linear weight)
    b1: [detect_dim]
    w2: [detect_dim, out_dim]
    b2: [out_dim]
    Returns [B, out_dim] f32.

    The kernel computes in x.dtype (weights are cast to match; accumulation is
    always f32).  bf16 x differs from the f32 reference by ~1e-2 relative
    error; keep f32 on v5e.
    """
    B, feature_dim = x.shape
    detect_dim = w1.shape[1]
    out_dim = w2.shape[1]
    assert block_b % _LANE == 0, "block_b must be a multiple of 128"

    cdt = x.dtype
    # Tiny parameter tensors: cast / reshape in the wrapper (negligible cost).
    w1_c = w1.astype(cdt)                                   # (F, H)
    w2_t = jnp.transpose(w2).astype(cdt)                    # (O, H)
    b1_r = b1.reshape(1, detect_dim).astype(jnp.float32)    # (1, H)
    b2_r = b2.reshape(out_dim, 1).astype(jnp.float32)       # (O, 1)

    tb = _choose_batch_tile(B, block_b)
    grid_b = pl.cdiv(B, tb)                  # ragged last tile handled by Pallas

    x_bytes = jnp.dtype(cdt).itemsize
    cost = pl.CostEstimate(
        flops=2 * B * (feature_dim * detect_dim + detect_dim * out_dim),
        transcendentals=B * detect_dim,
        bytes_accessed=(B * feature_dim * x_bytes                        # x
                        + (feature_dim + out_dim) * detect_dim * x_bytes  # w1,w2
                        + (detect_dim + out_dim) * 4                      # b1,b2
                        + out_dim * B * 4),                               # out_T
    )

    out_t = pl.pallas_call(
        _detector_kernel,
        out_shape=jax.ShapeDtypeStruct((out_dim, B), jnp.float32),
        grid=(grid_b,),
        in_specs=[
            # x: streamed / tiled over the batch axis.
            pl.BlockSpec((tb, feature_dim), lambda i: (i, 0)),
            # Weights & biases: constant index maps -> resident in VMEM.
            pl.BlockSpec((feature_dim, detect_dim), lambda i: (0, 0)),
            pl.BlockSpec((1, detect_dim), lambda i: (0, 0)),
            pl.BlockSpec((out_dim, detect_dim), lambda i: (0, 0)),
            pl.BlockSpec((out_dim, 1), lambda i: (0, 0)),
        ],
        # Transposed output: lane-dense along batch, 8 B of real data per row.
        out_specs=pl.BlockSpec((out_dim, tb), lambda i: (0, i)),
        compiler_params=pltpu.CompilerParams(
            dimension_semantics=("parallel",)),
        cost_estimate=cost,
    )(x, w1_c, b1_r, w2_t, b2_r)

    return jnp.transpose(out_t)              # [B, out_dim]; tiny XLA transpose


def _ref_forward(x, w1, b1, w2, b2):
    f = jax.nn.sigmoid(x @ w1 + b1)
    return f @ w2 + b2


if __name__ == "__main__":
    # Config consistent with the module: feature_dim=32, detect_dim=16, out=2.
    feature_dim = 32
    detect_dim = 16
    out_dim = 2

    key = jax.random.PRNGKey(0)
    kx, k1, kb1, k2, kb2, kx2 = jax.random.split(key, 6)

    # Deterministic parameter init (Kaiming-uniform-ish scale like nn.Linear).
    w1 = jax.random.uniform(k1, (feature_dim, detect_dim), dtype=jnp.float32,
                            minval=-1.0, maxval=1.0) / jnp.sqrt(feature_dim)
    b1 = jax.random.uniform(kb1, (detect_dim,), dtype=jnp.float32,
                            minval=-1.0, maxval=1.0) / jnp.sqrt(feature_dim)
    w2 = jax.random.uniform(k2, (detect_dim, out_dim), dtype=jnp.float32,
                            minval=-1.0, maxval=1.0) / jnp.sqrt(detect_dim)
    b2 = jax.random.uniform(kb2, (out_dim,), dtype=jnp.float32,
                            minval=-1.0, maxval=1.0) / jnp.sqrt(detect_dim)

    # --- Small deployment-like batch (single full-extent tile). -------------
    batch = 8
    x = jax.random.normal(kx, (batch, feature_dim), dtype=jnp.float32)
    out = jax.block_until_ready(detector_v2_forward(x, w1, b1, w2, b2))
    ref = _ref_forward(x, w1, b1, w2, b2)
    assert out.shape == (batch, out_dim)
    assert jnp.allclose(out, ref, atol=1e-4, rtol=1e-4), "mismatch (batch=8)"

    # --- Larger, ragged batch exercising the tiled + masked-edge path. ------
    batch2 = 300
    x2 = jax.random.normal(kx2, (batch2, feature_dim), dtype=jnp.float32)
    out2 = jax.block_until_ready(
        detector_v2_forward(x2, w1, b1, w2, b2, block_b=128))  # grid of 3 tiles
    ref2 = _ref_forward(x2, w1, b1, w2, b2)
    assert out2.shape == (batch2, out_dim)
    assert jnp.allclose(out2, ref2, atol=1e-4, rtol=1e-4), "mismatch (batch=300)"

    print("KERNEL_OK")
</pallas_src>

<mosaic_0001>
module attributes {stable_mosaic.version = 11 : i64} {
  func.func @_detector_kernel(%arg0: i32, %arg1: memref<8x32xf32, #tpu.memory_space<vmem>>, %arg2: memref<32x16xf32, #tpu.memory_space<vmem>>, %arg3: memref<1x16xf32, #tpu.memory_space<vmem>>, %arg4: memref<2x16xf32, #tpu.memory_space<vmem>>, %arg5: memref<2x1xf32, #tpu.memory_space<vmem>>, %arg6: memref<2x8xf32, #tpu.memory_space<vmem>>) attributes {dimension_semantics = [#tpu.dimension_semantics<parallel>], iteration_bounds = array<i64: 1>, scalar_prefetch = 0 : i64, scratch_operands = 0 : i64, tpu.core_type = #tpu.core_type<tc>, window_params = [{transform_indices = @transform_0, window_bounds = array<i64: 8, 32>}, {pipeline_mode = #tpu.pipeline_mode<synchronous>, transform_indices = @transform_1, window_bounds = array<i64: 32, 16>}, {pipeline_mode = #tpu.pipeline_mode<synchronous>, transform_indices = @transform_2, window_bounds = array<i64: 1, 16>}, {pipeline_mode = #tpu.pipeline_mode<synchronous>, transform_indices = @transform_3, window_bounds = array<i64: 2, 16>}, {pipeline_mode = #tpu.pipeline_mode<synchronous>, transform_indices = @transform_4, window_bounds = array<i64: 2, 1>}, {transform_indices = @transform_5, window_bounds = array<i64: 2, 8>}]} {
    %c0 = arith.constant 0 : index
    %c0_0 = arith.constant 0 : index
    %0 = vector.load %arg1[%c0, %c0_0] : memref<8x32xf32, #tpu.memory_space<vmem>>, vector<8x32xf32>
    %c0_1 = arith.constant 0 : index
    %c0_2 = arith.constant 0 : index
    %1 = vector.load %arg2[%c0_1, %c0_2] : memref<32x16xf32, #tpu.memory_space<vmem>>, vector<32x16xf32>
    %cst = arith.constant dense<0.000000e+00> : vector<8x16xf32>
    %2 = tpu.matmul %0, %1, %cst {dimension_numbers = #tpu.dot_dimension_numbers<[1], [0], [0], [1], [0, 0, 1, 1], [], []>} : vector<8x32xf32>, vector<32x16xf32>, vector<8x16xf32> -> vector<8x16xf32>
    %c0_3 = arith.constant 0 : index
    %c0_4 = arith.constant 0 : index
    %3 = vector.load %arg3[%c0_3, %c0_4] : memref<1x16xf32, #tpu.memory_space<vmem>>, vector<1x16xf32>
    %4 = vector.broadcast %3 : vector<1x16xf32> to vector<8x16xf32>
    %5 = arith.addf %2, %4 : vector<8x16xf32>
    %6 = arith.negf %5 : vector<8x16xf32>
    %7 = math.exp %6 : vector<8x16xf32>
    %cst_5 = arith.constant 1.000000e+00 : f32
    %8 = vector.broadcast %cst_5 : f32 to vector<8x16xf32>
    %9 = arith.addf %8, %7 : vector<8x16xf32>
    %10 = arith.divf %8, %9 : vector<8x16xf32>
    %c0_6 = arith.constant 0 : index
    %c0_7 = arith.constant 0 : index
    %11 = vector.load %arg4[%c0_6, %c0_7] : memref<2x16xf32, #tpu.memory_space<vmem>>, vector<2x16xf32>
    %cst_8 = arith.constant dense<0.000000e+00> : vector<2x8xf32>
    %12 = tpu.matmul %11, %10, %cst_8 {dimension_numbers = #tpu.dot_dimension_numbers<[1], [1], [0], [0], [0, 0, 1, 0], [], []>} : vector<2x16xf32>, vector<8x16xf32>, vector<2x8xf32> -> vector<2x8xf32>
    %c0_9 = arith.constant 0 : index
    %c0_10 = arith.constant 0 : index
    %13 = vector.load %arg5[%c0_9, %c0_10] : memref<2x1xf32, #tpu.memory_space<vmem>>, vector<2x1xf32>
    %14 = vector.broadcast %13 : vector<2x1xf32> to vector<2x8xf32>
    %15 = arith.addf %12, %14 : vector<2x8xf32>
    %c0_11 = arith.constant 0 : index
    %c0_12 = arith.constant 0 : index
    %16 = vector.load %arg6[%c0_11, %c0_12] : memref<2x8xf32, #tpu.memory_space<vmem>>, vector<2x8xf32>
    tpu.vector_store %arg6[%c0_11, %c0_12], %15 {strides = array<i32>} : memref<2x8xf32, #tpu.memory_space<vmem>>, vector<2x8xf32>,
    return
  }
  func.func @transform_0(%arg0: i32) -> (i32, i32) {
    %c0_i32 = arith.constant 0 : i32
    %c0_i32_0 = arith.constant 0 : i32
    return %arg0, %c0_i32 : i32, i32
  }
  func.func @transform_1(%arg0: i32) -> (i32, i32) {
    %c0_i32 = arith.constant 0 : i32
    %c0_i32_0 = arith.constant 0 : i32
    %c0_i32_1 = arith.constant 0 : i32
    return %c0_i32, %c0_i32_0 : i32, i32
  }
  func.func @transform_2(%arg0: i32) -> (i32, i32) {
    %c0_i32 = arith.constant 0 : i32
    %c0_i32_0 = arith.constant 0 : i32
    %c0_i32_1 = arith.constant 0 : i32
    return %c0_i32, %c0_i32_0 : i32, i32
  }
  func.func @transform_3(%arg0: i32) -> (i32, i32) {
    %c0_i32 = arith.constant 0 : i32
    %c0_i32_0 = arith.constant 0 : i32
    %c0_i32_1 = arith.constant 0 : i32
    return %c0_i32, %c0_i32_0 : i32, i32
  }
  func.func @transform_4(%arg0: i32) -> (i32, i32) {
    %c0_i32 = arith.constant 0 : i32
    %c0_i32_0 = arith.constant 0 : i32
    %c0_i32_1 = arith.constant 0 : i32
    return %c0_i32, %c0_i32_0 : i32, i32
  }
  func.func @transform_5(%arg0: i32) -> (i32, i32) {
    %c0_i32 = arith.constant 0 : i32
    %c0_i32_0 = arith.constant 0 : i32
    return %c0_i32, %arg0 : i32, i32
  }
}

</mosaic_0001>

<llo_original>
// kernel: tpu_custom_call.1
$region0: #{tpu_custom_call.1}
  #allocation0 [shape = 'u32[]', space=smem, size = 0x4, offset = 0x4, fixed_abs, tag = 'smem constant byte address 0x4 - core index']
  #allocation1 [shape = 'u32[144,128]{1,0:T(1,128)}', space=vmem, size = 0x12000, scoped, tag = 'internal scratch']
  %s0 = inlined_call_operand.vmem [shape: f32[8,32], index: 0, kind: input, shape index: {}]
  %s1 = inlined_call_operand.vmem [shape: f32[32,16], index: 1, kind: input, shape index: {}]
  %s2 = inlined_call_operand.vmem [shape: f32[1,16], index: 2, kind: input, shape index: {}]
  %s3 = inlined_call_operand.vmem [shape: f32[2,16], index: 3, kind: input, shape index: {}]
  %s4 = inlined_call_operand.vmem [shape: f32[2,1], index: 4, kind: input, shape index: {}]
  %s5 = inlined_call_operand.hbm [shape: f32[2,8], index: 5, kind: output, shape index: {}]
  %s6 = sld [smem:[#allocation0]]
  $region30: #{tpu_custom_call.1} parent=0
    _
  %s8 = ssub.s32 1, %s6
  %s9 = scalar_select 0, %s8, %s6
  $region1: #{tpu_custom_call.1} parent=0
    #allocation2 [shape = 'u8[1024]{0}', space=vmem, size = 0x400, scoped, tag = 'output window, operand 0, single buffered']
    #allocation3 [shape = 's32[1]{0}', space=sflag, size = 0x4, scoped, tag = 'scoped memory for tpu_custom_call.1']
    %10 = vsyncpa [#allocation3], 0
    // Predicated region
    $region2: #{tpu_custom_call.1} parent=1 // pred_check
      _
    $region3: #{tpu_custom_call.1} parent=1 // pred_check_branch
      %12 = sbr.rel (0) target = $region5
    $region4: #{tpu_custom_call.1} parent=1 // pred_region
      _
    $region5: #{tpu_custom_call.1} parent=1 // pred_fallthru
      _
    // Predicated region
    $region6: #{tpu_custom_call.1} parent=1 // pred_check
      _
    $region7: #{tpu_custom_call.1} parent=1 // pred_check_branch
      %14 = sbr.rel (0) target = $region9
    $region8: #{tpu_custom_call.1} parent=1 // pred_region
      _
    $region9: #{tpu_custom_call.1} parent=1 // pred_fallthru
      _
    // Predicated region
    $region10: #{tpu_custom_call.1} parent=1 // pred_check
      _
    $region11: #{tpu_custom_call.1} parent=1 // pred_check_branch
      %16 = sbr.rel (0) target = $region13
    $region12: #{tpu_custom_call.1} parent=1 // pred_region
      _
    $region13: #{tpu_custom_call.1} parent=1 // pred_fallthru
      _
    // Predicated region
    $region14: #{tpu_custom_call.1} parent=1 // pred_check
      _
    $region15: #{tpu_custom_call.1} parent=1 // pred_check_branch
      %18 = sbr.rel (0) target = $region17
    $region16: #{tpu_custom_call.1} parent=1 // pred_region
      _
    $region17: #{tpu_custom_call.1} parent=1 // pred_fallthru
      _
    // Predicated region
    $region18: #{tpu_custom_call.1} parent=1 // pred_check
      _
    $region19: #{tpu_custom_call.1} parent=1 // pred_check_branch
      %20 = sbr.rel (0) target = $region21
    $region20: #{tpu_custom_call.1} parent=1 // pred_region
      _
    $region21: #{tpu_custom_call.1} parent=1 // pred_fallthru
      _
    %v21 = vld [vmem:[%s0] sm:$0xff]
    %v22 = vld [vmem:[%s1] sm:$0xff]
    %v23 = vld [vmem:[%s1 + $0x8] sm:$0xff]
    %v24 = vld [vmem:[%s1 + $0x10] sm:$0xff]
    %v25 = vld [vmem:[%s1 + $0x18] sm:$0xff]
    %v26 = vld [vmem:[%s2] sm:$0x1]
    %v28 = vlaneseq
    %v29 = vshrl.u32 %v28, 7
    %v30 = vsub.s32 0, %v29
    %v31 = vrot.slane %v26, %v30
    %vm33 = vcmask 261120
    %v35 = vsel %vm33, %v21, 0
    %37 = vmatprep.subr.mxu0 0.0
    %38 = vmatpush1.msra.mxu0 0.0
    %39 = vmatprep.subr.mxu0 0.0
    %40 = vmatpush1.msra.mxu0 0.0
    %41 = vmatprep.subr.mxu0 0.0
    %42 = vmatpush1.msra.mxu0 0.0
    %43 = vmatprep.subr.mxu0 0.0
    %44 = vmatpush1.msra.mxu0 0.0
    %45 = vmatprep.subr.mxu0 0.0
    %46 = vmatpush1.msra.mxu0 0.0
    %47 = vmatprep.subr.mxu0 0.0
    %48 = vmatpush1.msra.mxu0 0.0
    %49 = vmatprep.subr.mxu0 0.0
    %50 = vmatpush1.msra.mxu0 0.0
    %51 = vmatprep.subr.mxu0 0.0
    %52 = vmatpush1.msra.mxu0 0.0
    %53 = vmatprep.subr.mxu0 0.0
    %54 = vmatpush1.msra.mxu0 0.0
    %55 = vmatprep.subr.mxu0 0.0
    %56 = vmatpush1.msra.mxu0 0.0
    %57 = vmatprep.subr.mxu0 0.0
    %58 = vmatpush1.msra.mxu0 0.0
    %59 = vmatprep.subr.mxu0 0.0
    %60 = vmatpush1.msra.mxu0 0.0
    %61 = vmatprep.subr.mxu0 0.0
    %62 = vmatpush1.msra.mxu0 %v25
    %63 = vmatprep.subr.mxu0 0.0
    %64 = vmatpush1.msra.mxu0 %v24
    %65 = vmatprep.subr.mxu0 0.0
    %66 = vmatpush1.msra.mxu0 %v23
    %67 = vmatprep.subr.mxu0 0.0
    %68 = vmatpush1.msra.mxu0 %v22
    %69 = vmatprep.subr.mxu0 0.0
    %70 = vmatpush2.msra.mxu0 0.0
    %71 = vmatprep.subr.mxu0 0.0
    %72 = vmatpush2.msra.mxu0 0.0
    %73 = vmatprep.subr.mxu0 0.0
    %74 = vmatpush2.msra.mxu0 0.0
    %75 = vmatprep.subr.mxu0 0.0
    %76 = vmatpush2.msra.mxu0 0.0
    %77 = vmatprep.subr.mxu0 0.0
    %78 = vmatpush2.msra.mxu0 0.0
    %79 = vmatprep.subr.mxu0 0.0
    %80 = vmatpush2.msra.mxu0 0.0
    %81 = vmatprep.subr.mxu0 0.0
    %82 = vmatpush2.msra.mxu0 0.0
    %83 = vmatprep.subr.mxu0 0.0
    %84 = vmatpush2.msra.mxu0 0.0
    %85 = vmatprep.subr.mxu0 0.0
    %86 = vmatpush2.msra.mxu0 0.0
    %87 = vmatprep.subr.mxu0 0.0
    %88 = vmatpush2.msra.mxu0 0.0
    %89 = vmatprep.subr.mxu0 0.0
    %90 = vmatpush2.msra.mxu0 0.0
    %91 = vmatprep.subr.mxu0 0.0
    %92 = vmatpush2.msra.mxu0 0.0
    %93 = vmatprep.subr.mxu0 0.0
    %94 = vmatpush2.msra.mxu0 0.0
    %95 = vmatprep.subr.mxu0 0.0
    %96 = vmatpush2.msra.mxu0 0.0
    %97 = vmatprep.subr.mxu0 0.0
    %98 = vmatpush2.msra.mxu0 0.0
    %99 = vmatprep.subr.mxu0 0.0
    %100 = vmatpush2.msra.mxu0 0.0
    %101 = vmatprep.mubr.f32.mxu0 0.0
    %102 = vmatmul.mubr.f32.gmra.mxu0 %v35
    %v103 = vpop.f32.mrf.mxu0
    %v104 = vadd.f32 %v31, %v103
    %v105 = vpop.f32.mrf.mxu0
    %106 = vdwg.mxu0
    %v107 = vxor.u32 %v104, 2147483648
    %v108 = vmul.f32 %v107, 1.442695
    %v109 = vpow.pop %v108
    %v110 = vadd.f32 %v109, 1.0
    %v111 = vrcp.pop %v110
    %v112 = vmul.f32 1.0, %v111
    %v113 = vld [vmem:[%s3] sm:$0x3]
    %v114 = vld [vmem:[%s4] sm:$0x3]
    %116 = vset.pattern.permute.xlu0 0
    %117 = vperm.xlu0 %116, %v114
    %v118 = vpop.permute.xlu0 %117
    %vm120 = vcmask 130048
    %v122 = vsel %vm120, %v113, 0
    %v125 = vsel %vm120, %v112, 0
    %127 = vmatprep.subr.mxu0 0.0
    %128 = vmatpush1.xpose.msra.mxu0 0.0
    %129 = vmatprep.subr.mxu0 0.0
    %130 = vmatpush1.xpose.msra.mxu0 0.0
    %131 = vmatprep.subr.mxu0 0.0
    %132 = vmatpush1.xpose.msra.mxu0 0.0
    %133 = vmatprep.subr.mxu0 0.0
    %134 = vmatpush1.xpose.msra.mxu0 0.0
    %135 = vmatprep.subr.mxu0 0.0
    %136 = vmatpush1.xpose.msra.mxu0 0.0
    %137 = vmatprep.subr.mxu0 0.0
    %138 = vmatpush1.xpose.msra.mxu0 0.0
    %139 = vmatprep.subr.mxu0 0.0
    %140 = vmatpush1.xpose.msra.mxu0 0.0
    %141 = vmatprep.subr.mxu0 0.0
    %142 = vmatpush1.xpose.msra.mxu0 0.0
    %143 = vmatprep.subr.mxu0 0.0
    %144 = vmatpush1.xpose.msra.mxu0 0.0
    %145 = vmatprep.subr.mxu0 0.0
    %146 = vmatpush1.xpose.msra.mxu0 0.0
    %147 = vmatprep.subr.mxu0 0.0
    %148 = vmatpush1.xpose.msra.mxu0 0.0
    %149 = vmatprep.subr.mxu0 0.0
    %150 = vmatpush1.xpose.msra.mxu0 0.0
    %151 = vmatprep.subr.mxu0 0.0
    %152 = vmatpush1.xpose.msra.mxu0 0.0
    %153 = vmatprep.subr.mxu0 0.0
    %154 = vmatpush1.xpose.msra.mxu0 0.0
    %155 = vmatprep.subr.mxu0 0.0
    %156 = vmatpush1.xpose.msra.mxu0 0.0
    %157 = vmatprep.subr.mxu0 0.0
    %158 = vmatpush1.xpose.msra.mxu0 %v125
    %159 = vmatprep.subr.mxu0 0.0
    %160 = vmatpush2.xpose.msra.mxu0 0.0
    %161 = vmatprep.subr.mxu0 0.0
    %162 = vmatpush2.xpose.msra.mxu0 0.0
    %163 = vmatprep.subr.mxu0 0.0
    %164 = vmatpush2.xpose.msra.mxu0 0.0
    %165 = vmatprep.subr.mxu0 0.0
    %166 = vmatpush2.xpose.msra.mxu0 0.0
    %167 = vmatprep.subr.mxu0 0.0
    %168 = vmatpush2.xpose.msra.mxu0 0.0
    %169 = vmatprep.subr.mxu0 0.0
    %170 = vmatpush2.xpose.msra.mxu0 0.0
    %171 = vmatprep.subr.mxu0 0.0
    %172 = vmatpush2.xpose.msra.mxu0 0.0
    %173 = vmatprep.subr.mxu0 0.0
    %174 = vmatpush2.xpose.msra.mxu0 0.0
    %175 = vmatprep.subr.mxu0 0.0
    %176 = vmatpush2.xpose.msra.mxu0 0.0
    %177 = vmatprep.subr.mxu0 0.0
    %178 = vmatpush2.xpose.msra.mxu0 0.0
    %179 = vmatprep.subr.mxu0 0.0
    %180 = vmatpush2.xpose.msra.mxu0 0.0
    %181 = vmatprep.subr.mxu0 0.0
    %182 = vmatpush2.xpose.msra.mxu0 0.0
    %183 = vmatprep.subr.mxu0 0.0
    %184 = vmatpush2.xpose.msra.mxu0 0.0
    %185 = vmatprep.subr.mxu0 0.0
    %186 = vmatpush2.xpose.msra.mxu0 0.0
    %187 = vmatprep.subr.mxu0 0.0
    %188 = vmatpush2.xpose.msra.mxu0 0.0
    %189 = vmatprep.subr.mxu0 0.0
    %190 = vmatpush2.xpose.msra.mxu0 0.0
    %191 = vmatprep.mubr.f32.mxu0 0.0
    %192 = vmatmul.mubr.f32.gmra.mxu0 %v122
    %v193 = vpop.f32.mrf.mxu0
    %v194 = vadd.f32 %v118, %v193
    %v195 = vpop.f32.mrf.mxu0
    %196 = vdwg.mxu0
    %vm197 = vcmask 58368
    %198 = vst.msk [vmem:[#allocation2] sm:$0x3] %vm197, %v194
    // Predicated region
    $region22: #{tpu_custom_call.1} parent=1 // pred_check
      _
    $region23: #{tpu_custom_call.1} parent=1 // pred_check_branch
      %200 = sbr.rel (0) target = $region25
    $region24: #{tpu_custom_call.1} parent=1 // pred_region
      %s202 = ssub.s32 32, 32
      %203 = vsyncadd [#allocation3], %s202
      %s205 = sshll.u32 [#allocation2], 4
      %s206 = int_to_ptr.vmem [resolvable:$true] %s205
      %208 = dma.vmem_to_hbm [thread:$0]  %s206, 32, %s5, [#allocation3]
    $region25: #{tpu_custom_call.1} parent=1 // pred_fallthru
      _
    // Predicated region
    $region26: #{tpu_custom_call.1} parent=1 // pred_check
      _
    $region27: #{tpu_custom_call.1} parent=1 // pred_check_branch
      %210 = sbr.rel (0) target = $region29
    $region28: #{tpu_custom_call.1} parent=1 // pred_region
      %211 = dma.done [#allocation3], 32
    $region29: #{tpu_custom_call.1} parent=1 // pred_fallthru
      _
    %212 = vsyncpa [#allocation3], 1

</llo_original>
